<compile_context>
chip_gen: v7x
topology: tpu7x:2x2x1
jax: 0.10.0
libtpu: 0.0.40
codegen_flags: <defaults>
</compile_context>

<pallas_src>
import functools

import jax
import jax.numpy as jnp
from jax.experimental import pallas as pl
from jax.experimental.pallas import tpu as pltpu


def _modified_nce_kernel(w_ref, x_ref, out_ref):
    # w_ref:  (TM, 1)  per-sample weights
    # x_ref:  (TM, K)  logits (class axis on lanes)
    # out_ref:(TM, 1) f32 per-row weighted cross-entropy
    x = x_ref[...].astype(jnp.float32)                                    # (TM, K)
    w = w_ref[...].astype(jnp.float32)                                    # (TM, 1)

    # Numerically stable log-sum-exp over the class (lane) axis, kept 2-D.
    m = jnp.max(x, axis=-1, keepdims=True)                                # (TM, 1)
    lse = m + jnp.log(jnp.sum(jnp.exp(x - m), axis=-1, keepdims=True))    # (TM, 1)

    per_row = lse - x[:, 0:1]                                             # (TM, 1)
    out_ref[...] = w * per_row                                            # (TM, 1)


def _pick_block_rows(bsz, k, itemsize, *, target_bytes=4 * 1024 * 1024,
                     max_rows=4096):
    """Rows per tile: ~4 MiB logits blocks, multiple of 8, clamped.

    4 MiB * 2 (double buffering) stays well under the default scoped-VMEM
    limits of every generation (16 MiB v5e / 32 MiB v6e & v7x), so the same
    choice is safe everywhere while keeping per-grid-step overhead amortized.
    """
    rows = max(8, (target_bytes // max(1, k * itemsize)) // 8 * 8)
    rows = min(rows, max_rows)
    if bsz <= rows:
        return bsz  # single full-batch block (block dim == array dim is legal)
    return rows


@functools.partial(jax.jit, static_argnames=("block_rows",))
def modified_nce_softmax_loss(weight, x, *, block_rows=None):
    """weight: [bsz]; x: [bsz, K, 1] (or [bsz, K]) logits. Returns scalar f32."""
    # Squeeze only the trailing singleton class-score dim (axis-safe).
    if x.ndim == 3 and x.shape[-1] == 1:
        x2d = jnp.squeeze(x, axis=-1)
    elif x.ndim == 2:
        x2d = x
    else:
        raise ValueError(f"expected [bsz, K, 1] or [bsz, K] logits, got {x.shape}")

    bsz, k = x2d.shape
    w2d = jnp.asarray(weight, jnp.float32).reshape(bsz, 1)

    tm = (block_rows if block_rows is not None
          else _pick_block_rows(bsz, k, x2d.dtype.itemsize))
    grid = (pl.cdiv(bsz, tm),)

    per_row = pl.pallas_call(
        _modified_nce_kernel,
        out_shape=jax.ShapeDtypeStruct((bsz, 1), jnp.float32),
        grid_spec=pltpu.PrefetchScalarGridSpec(
            num_scalar_prefetch=0,
            grid=grid,
            in_specs=[
                pl.BlockSpec((tm, 1), lambda i: (i, 0)),   # weight
                pl.BlockSpec((tm, k), lambda i: (i, 0)),   # logits
            ],
            out_specs=pl.BlockSpec((tm, 1), lambda i: (i, 0)),
        ),
        compiler_params=pltpu.CompilerParams(
            dimension_semantics=("parallel",),             # shards across TCs on v7x
        ),
    )(w2d, x2d)

    # Tiny (bsz-element) final reduction in XLA == torch.dot(weight, per_sample).
    return jnp.sum(per_row)


def _reference(weight, x):
    x2d = jnp.squeeze(x, axis=-1).astype(jnp.float32)
    per = jax.nn.logsumexp(x2d, axis=-1) - x2d[:, 0]
    return jnp.dot(jnp.asarray(weight, jnp.float32), per)


if __name__ == "__main__":
    key = jax.random.PRNGKey(0)
    k0, k1, k2, k3, k4, k5 = jax.random.split(key, 6)

    # Case 1: shapes implied by the module: x [bsz, K, 1], weight [bsz].
    bsz, num_contrast = 8, 128
    x = jax.random.normal(k0, (bsz, num_contrast, 1), dtype=jnp.float32)
    weight = jax.random.uniform(k1, (bsz,), dtype=jnp.float32)

    loss = modified_nce_softmax_loss(weight, x)
    jax.block_until_ready(loss)
    ref = _reference(weight, x)
    assert jnp.allclose(loss, ref, rtol=1e-5, atol=1e-5), (loss, ref)

    # Case 2: multi-tile grid with a ragged last batch block (tiling path).
    bsz_b, k_b = 20, 256
    x_b = jax.random.normal(k2, (bsz_b, k_b, 1), dtype=jnp.float32)
    w_b = jax.random.uniform(k3, (bsz_b,), dtype=jnp.float32)

    loss_b = modified_nce_softmax_loss(w_b, x_b, block_rows=8)
    jax.block_until_ready(loss_b)
    ref_b = _reference(w_b, x_b)
    assert jnp.allclose(loss_b, ref_b, rtol=1e-5, atol=1e-5), (loss_b, ref_b)

    # Case 3: bf16 logits (compute still happens in f32 inside the kernel).
    bsz_c, k_c = 16, 384
    x_c = jax.random.normal(k4, (bsz_c, k_c, 1), dtype=jnp.float32).astype(jnp.bfloat16)
    w_c = jax.random.uniform(k5, (bsz_c,), dtype=jnp.float32)

    loss_c = modified_nce_softmax_loss(w_c, x_c)
    jax.block_until_ready(loss_c)
    ref_c = _reference(w_c, x_c)
    assert jnp.allclose(loss_c, ref_c, rtol=1e-3, atol=1e-3), (loss_c, ref_c)

    print("KERNEL_OK")
</pallas_src>

<mosaic_0001>
module attributes {stable_mosaic.version = 11 : i64} {
  func.func @_modified_nce_kernel(%arg0: i32, %arg1: memref<8x1xf32, #tpu.memory_space<vmem>>, %arg2: memref<8x128xf32, #tpu.memory_space<vmem>>, %arg3: memref<8x1xf32, #tpu.memory_space<vmem>>) attributes {dimension_semantics = [#tpu.dimension_semantics<parallel>], iteration_bounds = array<i64: 1>, scalar_prefetch = 0 : i64, scratch_operands = 0 : i64, tpu.core_type = #tpu.core_type<tc>, window_params = [{transform_indices = @transform_0, window_bounds = array<i64: 8, 1>}, {transform_indices = @transform_1, window_bounds = array<i64: 8, 128>}, {transform_indices = @transform_2, window_bounds = array<i64: 8, 1>}]} {
    %c0 = arith.constant 0 : index
    %c0_0 = arith.constant 0 : index
    %0 = vector.load %arg2[%c0, %c0_0] : memref<8x128xf32, #tpu.memory_space<vmem>>, vector<8x128xf32>
    %c0_1 = arith.constant 0 : index
    %c0_2 = arith.constant 0 : index
    %1 = vector.load %arg1[%c0_1, %c0_2] : memref<8x1xf32, #tpu.memory_space<vmem>>, vector<8x1xf32>
    %cst = arith.constant dense<0xFF800000> : vector<8xf32>
    %2 = vector.multi_reduction <maximumf>, %0, %cst [1] : vector<8x128xf32> to vector<8xf32>
    %3 = vector.shape_cast %2 : vector<8xf32> to vector<8x1xf32>
    %4 = vector.broadcast %3 : vector<8x1xf32> to vector<8x128xf32>
    %5 = arith.subf %0, %4 : vector<8x128xf32>
    %6 = math.exp %5 : vector<8x128xf32>
    %cst_3 = arith.constant dense<0.000000e+00> : vector<8xf32>
    %7 = vector.multi_reduction <add>, %6, %cst_3 [1] : vector<8x128xf32> to vector<8xf32>
    %8 = vector.shape_cast %7 : vector<8xf32> to vector<8x1xf32>
    %9 = math.log %8 : vector<8x1xf32>
    %10 = arith.addf %3, %9 : vector<8x1xf32>
    %11 = vector.extract_strided_slice %0 {offsets = [0, 0], sizes = [8, 1], strides = [1, 1]} : vector<8x128xf32> to vector<8x1xf32>
    %12 = arith.subf %10, %11 : vector<8x1xf32>
    %13 = arith.mulf %1, %12 : vector<8x1xf32>
    %c0_4 = arith.constant 0 : index
    %c0_5 = arith.constant 0 : index
    %14 = vector.load %arg3[%c0_4, %c0_5] : memref<8x1xf32, #tpu.memory_space<vmem>>, vector<8x1xf32>
    tpu.vector_store %arg3[%c0_4, %c0_5], %13 {strides = array<i32>} : memref<8x1xf32, #tpu.memory_space<vmem>>, vector<8x1xf32>,
    return
  }
  func.func @transform_0(%arg0: i32) -> (i32, i32) {
    %c0_i32 = arith.constant 0 : i32
    %c0_i32_0 = arith.constant 0 : i32
    return %arg0, %c0_i32 : i32, i32
  }
  func.func @transform_1(%arg0: i32) -> (i32, i32) {
    %c0_i32 = arith.constant 0 : i32
    %c0_i32_0 = arith.constant 0 : i32
    return %arg0, %c0_i32 : i32, i32
  }
  func.func @transform_2(%arg0: i32) -> (i32, i32) {
    %c0_i32 = arith.constant 0 : i32
    %c0_i32_0 = arith.constant 0 : i32
    return %arg0, %c0_i32 : i32, i32
  }
}

</mosaic_0001>

<llo_original>
// kernel: modified_nce_softmax_loss.1
$region0: #{modified_nce_softmax_loss.1}
  #allocation0 [shape = 'u32[]', space=smem, size = 0x4, offset = 0x4, fixed_abs, tag = 'smem constant byte address 0x4 - core index']
  #allocation1 [shape = 'u32[144,128]{1,0:T(1,128)}', space=vmem, size = 0x12000, scoped, tag = 'internal scratch']
  %s0 = inlined_call_operand.vmem [shape: f32[8,1], index: 0, kind: input, shape index: {}]
  %s1 = inlined_call_operand.vmem [shape: f32[8,128], index: 1, kind: input, shape index: {}]
  %s2 = inlined_call_operand.vmem [shape: f32[8,1], index: 2, kind: output, shape index: {}]
  %s3 = sld [smem:[#allocation0]]
  $region18: #{modified_nce_softmax_loss.1} parent=0
    _
  %s5 = ssub.s32 1, %s3
  %s6 = scalar_select 0, %s5, %s3
  // Predicated region
  $region2: #{modified_nce_softmax_loss.1} parent=0 // pred_check
    _
  $region3: #{modified_nce_softmax_loss.1} parent=0 // pred_check_branch
    %8 = sbr.rel (0) target = $region5
  $region4: #{modified_nce_softmax_loss.1} parent=0 // pred_region
    _
  $region5: #{modified_nce_softmax_loss.1} parent=0 // pred_fallthru
    _
  // Predicated region
  $region6: #{modified_nce_softmax_loss.1} parent=0 // pred_check
    _
  $region7: #{modified_nce_softmax_loss.1} parent=0 // pred_check_branch
    %10 = sbr.rel (0) target = $region9
  $region8: #{modified_nce_softmax_loss.1} parent=0 // pred_region
    _
  $region9: #{modified_nce_softmax_loss.1} parent=0 // pred_fallthru
    _
  %v11 = vld [vmem:[%s1] sm:$0xff]
  %v12 = vld [vmem:[%s0] sm:$0xff]
  %13 = vmax.xlane.f32.xlu0 %v11
  %v14 = vpop.xlane.xlu0 %13
  %v15 = vsub.f32 %v11, %v14
  %v16 = vmul.f32 %v15, 1.442695
  %v17 = vpow.pop %v16
  %18 = vadd.xlane.f32.xlu0 %v17
  %v19 = vpop.xlane.xlu0 %18
  %v20 = vlog2.pop %v19
  %v21 = vmul.f32 %v20, 0.6931472
  %v22 = vadd.f32 %v14, %v21
  %v23 = vsub.f32 %v22, %v11
  %v24 = vmul.f32 %v12, %v23
  %vm25 = vcmask 7168
  %26 = vst.msk [vmem:[%s2] sm:$0xff] %vm25, %v24
  // Predicated region
  $region10: #{modified_nce_softmax_loss.1} parent=0 // pred_check
    _
  $region11: #{modified_nce_softmax_loss.1} parent=0 // pred_check_branch
    %28 = sbr.rel (0) target = $region13
  $region12: #{modified_nce_softmax_loss.1} parent=0 // pred_region
    _
  $region13: #{modified_nce_softmax_loss.1} parent=0 // pred_fallthru
    _
  // Predicated region
  $region14: #{modified_nce_softmax_loss.1} parent=0 // pred_check
    _
  $region15: #{modified_nce_softmax_loss.1} parent=0 // pred_check_branch
    %30 = sbr.rel (0) target = $region17
  $region16: #{modified_nce_softmax_loss.1} parent=0 // pred_region
    _
  $region17: #{modified_nce_softmax_loss.1} parent=0 // pred_fallthru
    _

</llo_original>
